<compile_context>
chip_gen: v6e
topology: v6e:2x2x1
jax: 0.10.0
libtpu: 0.0.40
codegen_flags: <defaults>
</compile_context>

<pallas_src>
import jax
import jax.numpy as jnp
from jax.experimental import pallas as pl
from jax.experimental.pallas import tpu as pltpu


# ---------------------------------------------------------------------------
# Kernel: identity via two HBM->HBM async DMAs (the only semantics the
# reference defines).  Refs are raw (un-tiled) arrays in pl.ANY space.
# ---------------------------------------------------------------------------
def _identity_dma_kernel(state_in, noise_in, state_out, noise_out,
                         sem_state, sem_noise):
    cp_state = pltpu.make_async_copy(state_in, state_out, sem_state)
    cp_noise = pltpu.make_async_copy(noise_in, noise_out, sem_noise)
    # Issue both DMAs so the copies overlap on the DMA engines, then wait.
    cp_state.start()
    cp_noise.start()
    cp_state.wait()
    cp_noise.wait()


# ---------------------------------------------------------------------------
# Forward wrapper (Policy.forward equivalent).
# ---------------------------------------------------------------------------
def policy_forward(state: jax.Array, noise: jax.Array):
    """Pallas equivalent of Policy().forward(state, noise): identity.

    The fastest possible faithful variant is `return state, noise` (no kernel
    at all); this routes the data through a single Pallas call that performs
    one HBM->HBM DMA per tensor, which is the copy roofline for a kernel that
    must actually execute.
    """
    out_shape = (
        jax.ShapeDtypeStruct(state.shape, state.dtype),
        jax.ShapeDtypeStruct(noise.shape, noise.dtype),
    )
    any_spec = pl.BlockSpec(memory_space=pl.ANY)

    # Zero-FLOP, bandwidth-only kernel: bytes = read + write of both arrays.
    bytes_moved = 2 * (
        state.size * jnp.dtype(state.dtype).itemsize
        + noise.size * jnp.dtype(noise.dtype).itemsize
    )

    state_out, noise_out = pl.pallas_call(
        _identity_dma_kernel,
        out_shape=out_shape,
        in_specs=[any_spec, any_spec],
        out_specs=(any_spec, any_spec),
        scratch_shapes=[
            pltpu.SemaphoreType.DMA(()),
            pltpu.SemaphoreType.DMA(()),
        ],
        cost_estimate=pl.CostEstimate(
            flops=0, transcendentals=0, bytes_accessed=int(bytes_moved)
        ),
    )(state, noise)

    return state_out, noise_out


if __name__ == "__main__":
    key = jax.random.PRNGKey(0)
    k_state, k_noise = jax.random.split(key)

    # Small shapes consistent with a (state, noise) policy signature.
    B, D = 2, 32
    state = jax.random.normal(k_state, (B, D), dtype=jnp.float32)
    noise = jax.random.normal(k_noise, (B, D), dtype=jnp.float32)

    fwd = jax.jit(policy_forward)
    state_out, noise_out = fwd(state, noise)
    jax.block_until_ready((state_out, noise_out))

    # Correctness: the only defined semantics is identity of the data path.
    assert state_out.shape == (B, D) and noise_out.shape == (B, D)
    assert state_out.dtype == state.dtype and noise_out.dtype == noise.dtype
    assert jnp.array_equal(state_out, state)
    assert jnp.array_equal(noise_out, noise)

    print("KERNEL_OK")
</pallas_src>

<mosaic_0001>
module attributes {stable_mosaic.version = 11 : i64} {
  func.func @_identity_dma_kernel(%arg0: memref<2x32xf32, #tpu.memory_space<any>>, %arg1: memref<2x32xf32, #tpu.memory_space<any>>, %arg2: memref<2x32xf32, #tpu.memory_space<any>>, %arg3: memref<2x32xf32, #tpu.memory_space<any>>, %arg4: memref<!tpu.dma_semaphore, #tpu.memory_space<semaphore_mem>>, %arg5: memref<!tpu.dma_semaphore, #tpu.memory_space<semaphore_mem>>) attributes {dimension_semantics = [], scalar_prefetch = 0 : i64, scratch_operands = 2 : i64, tpu.core_type = #tpu.core_type<tc>} {
    tpu.enqueue_dma source(%arg0 : memref<2x32xf32, #tpu.memory_space<any>>) target(%arg2 : memref<2x32xf32, #tpu.memory_space<any>>) target_semaphore(%arg4 : memref<!tpu.dma_semaphore, #tpu.memory_space<semaphore_mem>>)
    tpu.enqueue_dma source(%arg1 : memref<2x32xf32, #tpu.memory_space<any>>) target(%arg3 : memref<2x32xf32, #tpu.memory_space<any>>) target_semaphore(%arg5 : memref<!tpu.dma_semaphore, #tpu.memory_space<semaphore_mem>>)
    tpu.wait_dma2 semaphore(%arg4 : memref<!tpu.dma_semaphore, #tpu.memory_space<semaphore_mem>>) src(%arg0 : memref<2x32xf32, #tpu.memory_space<any>>) dst(%arg2 : memref<2x32xf32, #tpu.memory_space<any>>)
    tpu.wait_dma2 semaphore(%arg5 : memref<!tpu.dma_semaphore, #tpu.memory_space<semaphore_mem>>) src(%arg1 : memref<2x32xf32, #tpu.memory_space<any>>) dst(%arg3 : memref<2x32xf32, #tpu.memory_space<any>>)
    return
  }
}

</mosaic_0001>

<llo_original>
// kernel: policy_forward.1
$region0: #{policy_forward.1}
  #allocation0 [shape = 'u32[]', space=smem, size = 0x4, offset = 0x4, fixed_abs, tag = 'smem constant byte address 0x4 - core index']
  #allocation1 [shape = 'u32[144,128]{1,0:T(1,128)}', space=vmem, size = 0x12000, scoped, tag = 'internal scratch']
  #allocation2 [shape = 's32[1]{0}', space=sflag, size = 0x4, scoped, tag = 'scratch operand']
  #allocation3 [shape = 's32[1]{0}', space=sflag, size = 0x4, scoped, tag = 'scratch operand']
  #allocation4 [shape = 's32[]', space=sflag, size = 0x4, offset = 0, fixed_abs, tag = 'sflag constant byte address 0x0 - dummy sync flag']
  #allocation5 [shape = 'u32[0]{0}', space=smem, size = 0, offset = 0, fixed_abs, tag = 'smem constant byte address 0x0 - null']
  #allocation6 [shape = 's32[]', space=sflag, size = 0x4, offset = 0, fixed_abs, tag = 'sflag constant byte address 0x0 - dummy sync flag']
  #allocation7 [shape = 'u32[0]{0}', space=smem, size = 0, offset = 0, fixed_abs, tag = 'smem constant byte address 0x0 - null']
  %s0 = inlined_call_operand.hbm [shape: f32[2,32], index: 0, kind: input, shape index: {}]
  %s1 = inlined_call_operand.hbm [shape: f32[2,32], index: 1, kind: input, shape index: {}]
  %s2 = inlined_call_operand.hbm [shape: f32[2,32], index: 2, kind: output, shape index: {0}]
  %s3 = inlined_call_operand.hbm [shape: f32[2,32], index: 3, kind: output, shape index: {1}]
  %4 = xla_tuple %s2, %s3
  %s5 = sld [smem:[#allocation0]]
  $region2: #{policy_forward.1} parent=0
    _
  %s7 = ssub.s32 1, %s5
  %s8 = scalar_select 0, %s7, %s5
  %s10 = sshll.u32 1, 14
  %s11 = sxor.u32 4294967295, %s10
  %15 = dma.general %s0, 32, %s2, [#allocation2], 131072, [#allocation5], 0, 0
  %s17 = sshll.u32 1, 14
  %s18 = sxor.u32 4294967295, %s17
  %22 = dma.general %s1, 32, %s3, [#allocation3], 131072, [#allocation7], 0, 0
  %s23 = smul.u32 2, 1
  %s24 = sshll.u32 %s23, 4
  %25 = dma.done [#allocation2], %s24
  %s26 = sshll.u32 %s23, 4
  %27 = dma.done [#allocation3], %s26
  %28 = vsyncmov [#allocation2]
  %s29 = vpop.sfrf %28
  %p30 = scmp.eq.s32.totalorder %s29, 0
  %p31 = pneg %p30
  %33 = shalt.err (%p31)
  %34 = vsyncmov [#allocation3]
  %s35 = vpop.sfrf %34
  %p36 = scmp.eq.s32.totalorder %s35, 0
  %p37 = pneg %p36
  %39 = shalt.err (%p37)

</llo_original>
